<compile_context>
chip_gen: v7x
topology: tpu7x:2x2x1
jax: 0.10.0
libtpu: 0.0.40
codegen_flags: <defaults>
</compile_context>

<pallas_src>
import functools

import numpy as np
import jax
import jax.numpy as jnp
from jax import lax
from jax.experimental import pallas as pl
from jax.experimental.pallas import tpu as pltpu

EPS = 1e-5


# ----------------------------------------------------------------------------
# Sizing helpers
# ----------------------------------------------------------------------------
def _pad_to(n, m):
    return -(-max(int(n), 1) // m) * m


def _vmem_caps():
    """(vmem_limit_bytes, tile_budget_bytes) from the real chip: limit = 75% of
    physical VMEM (v5e/v6e: 96 MiB, v7x: 48 MiB); tiles sized against 50% so
    double-buffering mis-counts / compiler scratch still have headroom."""
    try:
        cap = int(pltpu.get_tpu_info().vmem_capacity_bytes)
    except Exception:
        cap = 64 * 1024 * 1024          # conservative fallback, safe everywhere
    return int(cap * 0.75), int(cap * 0.50)


def _pick_tile(nh, per_row_bytes, fixed_bytes, budget_bytes, min_steps=4,
               max_tile=None):
    """NH rows per block: a multiple of 8 (sublane tiling) -- or the full NH
    when NH <= 8 -- sized to the VMEM budget and capped so the grid keeps at
    least `min_steps` steps (DMA/compute overlap + megacore sharding) when NH
    allows.  No divisibility requirement: the last block may be partial."""
    if nh <= 8:
        return nh
    avail = max(budget_bytes - fixed_bytes, 8 * per_row_bytes)
    tile = (avail // per_row_bytes) // 8 * 8
    if nh >= min_steps * 8:
        tile = min(tile, (nh // min_steps) // 8 * 8)
    tile = min(tile, nh // 8 * 8)
    if max_tile is not None:
        tile = min(tile, int(max_tile) // 8 * 8)
    return max(8, int(tile))


def _combine_stats(sums, m2s, counts, total):
    """Chan-style parallel combination of per-group (sum, M2, count) partials.
    sums/m2s: (G, Cout); counts: (G, 1); total: scalar.  Cancellation-free."""
    gmean = jnp.sum(sums, axis=0) / total
    dev = sums / jnp.maximum(counts, 1.0) - gmean[None, :]
    gm2 = jnp.sum(m2s, axis=0) + jnp.sum(counts * dev * dev, axis=0)
    var = jnp.maximum(gm2 / total, 0.0)
    return gmean, var


# ----------------------------------------------------------------------------
# Folded (lane-dense, small-channel) path kernels
#   x block: (TILE, W*Cin)   w: (W*Cin, 2*W*Cout)   y block: (TILE, 2*W*Cout)
# ----------------------------------------------------------------------------
def _folded_stats_kernel(x_ref, w_ref, stats_ref, *, nh):
    tile = x_ref.shape[0]
    y = jnp.dot(x_ref[...], w_ref[...], preferred_element_type=jnp.float32)
    gid = pl.program_id(0) * tile + lax.broadcasted_iota(jnp.int32, (tile, 1), 0)
    mask = gid < nh                                     # padded rows of last block
    n = jnp.sum(mask.astype(jnp.float32), axis=0, keepdims=True)      # (1, 1)
    s = jnp.sum(jnp.where(mask, y, 0.0), axis=0, keepdims=True)       # (1, L)
    mu = s / jnp.maximum(n, 1.0)
    d = jnp.where(mask, y - mu, 0.0)
    m2 = jnp.sum(d * d, axis=0, keepdims=True)
    stats_ref[...] = jnp.concatenate([s, m2], axis=0)   # (2, L)


def _folded_apply_kernel(x_ref, w_ref, scale_ref, shift_ref, y_ref):
    # One MXU matmul per tile; output stored lane-dense (no masked vst).
    y = jnp.dot(x_ref[...], w_ref[...], preferred_element_type=jnp.float32)
    y_ref[...] = (y * scale_ref[...] + shift_ref[...]).astype(y_ref.dtype)


# ----------------------------------------------------------------------------
# Wide-channel fallback kernels (Cin / 2*Cout already lane-dense)
# ----------------------------------------------------------------------------
def _conv_even_odd(x_ref, w_ref):
    """x_ref: (TILE, W, Cin); w_ref: (Cin, 4*Cout) with the 4 kW taps
    concatenated.  Returns (even, odd), each (TILE*W, Cout) f32: output
    columns 2t / 2t+1."""
    TILE, W, Cin = x_ref.shape
    Cout = w_ref.shape[1] // 4
    M = TILE * W
    x2 = x_ref[...].reshape(M, Cin)                     # keep input dtype on MXU
    z = jnp.dot(x2, w_ref[...], preferred_element_type=jnp.float32)   # (M, 4*Cout)
    z0 = z[:, 0 * Cout:1 * Cout]
    z1 = z[:, 1 * Cout:2 * Cout]
    z2 = z[:, 2 * Cout:3 * Cout]
    z3 = z[:, 3 * Cout:4 * Cout]
    # even[t] = z1[t] + z3[t-1] ; odd[t] = z2[t] + z0[t+1]  (zero at W edges).
    # XLU rolls + a cheap VPU edge mask; rows wrapping across a W boundary are
    # exactly the rows the mask zeroes.
    row = lax.broadcasted_iota(jnp.int32, (M, 1), 0)
    wpos = row % W
    z3_sh = jnp.where(wpos == 0, 0.0, pltpu.roll(z3, shift=1, axis=0))
    z0_sh = jnp.where(wpos == W - 1, 0.0, pltpu.roll(z0, shift=M - 1, axis=0))
    return z1 + z3_sh, z2 + z0_sh


def _wide_stats_kernel(x_ref, w_ref, stats_ref, *, nh):
    TILE, W, _ = x_ref.shape
    M = TILE * W
    even, odd = _conv_even_odd(x_ref, w_ref)
    row = lax.broadcasted_iota(jnp.int32, (M, 1), 0)
    mask = (pl.program_id(0) * TILE + row // W) < nh
    n = 2.0 * jnp.sum(mask.astype(jnp.float32), axis=0, keepdims=True)
    s = (jnp.sum(jnp.where(mask, even, 0.0), axis=0, keepdims=True)
         + jnp.sum(jnp.where(mask, odd, 0.0), axis=0, keepdims=True))
    mu = s / jnp.maximum(n, 1.0)
    de = jnp.where(mask, even - mu, 0.0)
    do = jnp.where(mask, odd - mu, 0.0)
    m2 = (jnp.sum(de * de, axis=0, keepdims=True)
          + jnp.sum(do * do, axis=0, keepdims=True))
    stats_ref[...] = jnp.concatenate([s, m2], axis=0)   # (2, Cout)


def _wide_apply_kernel(x_ref, w_ref, scale_ref, shift_ref, y_ref):
    TILE, W, _ = x_ref.shape
    Cout = w_ref.shape[1] // 4
    even, odd = _conv_even_odd(x_ref, w_ref)
    scale = scale_ref[...]
    shift = shift_ref[...]
    even = even * scale + shift
    odd = odd * scale + shift
    # Lane layout [even | odd]: (NH, W, 2*Cout) reshapes contiguously to
    # (N, H, 2W, Cout) in the wrapper -> the width interleave is free.
    y = jnp.concatenate([even, odd], axis=-1)
    y_ref[...] = y.reshape(TILE, W, 2 * Cout).astype(y_ref.dtype)


# ----------------------------------------------------------------------------
# Wrapper
# ----------------------------------------------------------------------------
@functools.partial(jax.jit, static_argnames=("force_wide", "max_tile"))
def up_pallas(x_nhwc, weight, gamma, beta, *, force_wide=False, max_tile=None):
    """x_nhwc: (N, H, W, Cin); weight: (Cin, Cout, 1, 4) [PyTorch layout];
    gamma/beta: (Cout,).  Returns (N, H, 2*W, Cout) in x dtype."""
    N, H, W, Cin = x_nhwc.shape
    Cout = weight.shape[1]
    Wout = 2 * W
    NH = N * H
    dtype = x_nhwc.dtype
    esz = jnp.dtype(dtype).itemsize

    vmem_limit, budget = _vmem_caps()
    cparams = pltpu.CompilerParams(
        dimension_semantics=("parallel",), vmem_limit_bytes=vmem_limit)

    wt = weight[:, :, 0, :].astype(jnp.float32)              # (Cin, Cout, 4)
    gamma32 = gamma.astype(jnp.float32)
    beta32 = beta.astype(jnp.float32)

    # Path choice: fold W into the lane axis when the channel counts are small
    # (otherwise >90% of every lane / DMA row is padding) and the folded weight
    # stays small; else use the wide-channel formulation.
    w_big_bytes = _pad_to(W * Cin, 8) * _pad_to(Wout * Cout, 128) * esz
    use_folded = ((not force_wide) and (min(Cin, 2 * Cout) < 128)
                  and (w_big_bytes <= 4 * 1024 * 1024))

    if use_folded:
        L_in, L_out = W * Cin, Wout * Cout
        # Folded deconv weight: W_big[wi*Cin+c, wo*Cout+co] = wgt[c, co, k]
        # where wo = 2*wi - 1 + k (k in 0..3), zero outside [0, Wout).
        P = np.zeros((4, W, Wout), np.float32)
        for k in range(4):
            for wi in range(W):
                wo = 2 * wi - 1 + k
                if 0 <= wo < Wout:
                    P[k, wi, wo] = 1.0
        w_big = jnp.einsum("kwv,cdk->wcvd", jnp.asarray(P), wt)
        w_big = w_big.reshape(L_in, L_out).astype(dtype)
        x2 = x_nhwc.reshape(NH, L_in)                        # contiguous, free

        per_row = (2 * _pad_to(L_in, 128) * esz              # x block, 2x buffered
                   + 2 * _pad_to(L_out, 128) * esz           # y block, 2x buffered
                   + 2 * _pad_to(L_out, 128) * 4)            # f32 matmul result/temps
        fixed = 2 * w_big_bytes + 4 * _pad_to(L_out, 128) * 4
        TILE = _pick_tile(NH, per_row, fixed, budget, max_tile=max_tile)
        num_tiles = pl.cdiv(NH, TILE)
        grid = (num_tiles,)

        x_spec = pl.BlockSpec((TILE, L_in), lambda i: (i, 0))
        w_spec = pl.BlockSpec((L_in, L_out), lambda i: (0, 0))

        # ---- Pass 1: per-tile centered partial stats.
        part = pl.pallas_call(
            functools.partial(_folded_stats_kernel, nh=NH),
            out_shape=jax.ShapeDtypeStruct((num_tiles, 2, L_out), jnp.float32),
            grid=grid,
            in_specs=[x_spec, w_spec],
            out_specs=pl.BlockSpec((None, 2, L_out), lambda i: (i, 0, 0)),
            compiler_params=cparams,
        )(x2, w_big)

        # ---- Tiny global combination (groups = tile x output-width position).
        n_valid = jnp.clip(NH - jnp.arange(num_tiles) * TILE, 0, TILE)
        counts = jnp.repeat(n_valid.astype(jnp.float32), Wout)[:, None]
        sums = part[:, 0, :].reshape(num_tiles * Wout, Cout)
        m2s = part[:, 1, :].reshape(num_tiles * Wout, Cout)
        mean, var = _combine_stats(sums, m2s, counts, jnp.float32(NH * Wout))

        scale = gamma32 * lax.rsqrt(var + EPS)
        shift = beta32 - mean * scale
        scale_ld = jnp.tile(scale, Wout).reshape(1, L_out)
        shift_ld = jnp.tile(shift, Wout).reshape(1, L_out)

        # ---- Pass 2: recompute deconv, apply global BN, lane-dense store.
        y = pl.pallas_call(
            _folded_apply_kernel,
            out_shape=jax.ShapeDtypeStruct((NH, L_out), dtype),
            grid=grid,
            in_specs=[x_spec, w_spec,
                      pl.BlockSpec((1, L_out), lambda i: (0, 0)),
                      pl.BlockSpec((1, L_out), lambda i: (0, 0))],
            out_specs=pl.BlockSpec((TILE, L_out), lambda i: (i, 0)),
            compiler_params=cparams,
        )(x2, w_big, scale_ld, shift_ld)
        # Free contiguous reshape: lane index = wo*Cout + co.
        return y.reshape(N, H, Wout, Cout)

    # ------------------ wide-channel fallback ---------------------------------
    # (Cin, Cout, 1, 4) -> (Cin, 4*Cout): tap k lives in columns [k*Cout:(k+1)*Cout].
    w_cat = jnp.transpose(wt, (0, 2, 1)).reshape(Cin, 4 * Cout).astype(dtype)
    x3 = x_nhwc.reshape(NH, W, Cin)

    per_row = (2 * W * _pad_to(Cin, 128) * esz
               + 2 * W * _pad_to(2 * Cout, 128) * esz
               + W * (_pad_to(4 * Cout, 128) + 4 * _pad_to(Cout, 128)) * 4)
    fixed = 2 * _pad_to(Cin, 8) * _pad_to(4 * Cout, 128) * esz
    TILE = _pick_tile(NH, per_row, fixed, budget, max_tile=max_tile)
    num_tiles = pl.cdiv(NH, TILE)
    grid = (num_tiles,)

    x_spec = pl.BlockSpec((TILE, W, Cin), lambda i: (i, 0, 0))
    w_spec = pl.BlockSpec((Cin, 4 * Cout), lambda i: (0, 0))

    part = pl.pallas_call(
        functools.partial(_wide_stats_kernel, nh=NH),
        out_shape=jax.ShapeDtypeStruct((num_tiles, 2, Cout), jnp.float32),
        grid=grid,
        in_specs=[x_spec, w_spec],
        out_specs=pl.BlockSpec((None, 2, Cout), lambda i: (i, 0, 0)),
        compiler_params=cparams,
    )(x3, w_cat)

    n_valid = jnp.clip(NH - jnp.arange(num_tiles) * TILE, 0, TILE).astype(jnp.float32)
    counts = (2.0 * W * n_valid)[:, None]
    mean, var = _combine_stats(part[:, 0, :], part[:, 1, :], counts,
                               jnp.float32(NH * W * 2))
    scale = gamma32 * lax.rsqrt(var + EPS)
    shift = beta32 - mean * scale

    y = pl.pallas_call(
        _wide_apply_kernel,
        out_shape=jax.ShapeDtypeStruct((NH, W, 2 * Cout), dtype),
        grid=grid,
        in_specs=[x_spec, w_spec,
                  pl.BlockSpec((1, Cout), lambda i: (0, 0)),
                  pl.BlockSpec((1, Cout), lambda i: (0, 0))],
        out_specs=pl.BlockSpec((TILE, W, 2 * Cout), lambda i: (i, 0, 0)),
        compiler_params=cparams,
    )(x3, w_cat, scale.reshape(1, Cout), shift.reshape(1, Cout))
    # Free contiguous reshape: lanes [even | odd] interleave into the width axis.
    return y.reshape(N, H, Wout, Cout)


# ----------------------------------------------------------------------------
# Pure-JAX reference: ConvTranspose2d([1,4], stride [1,2], pad [0,1], no bias)
# + BatchNorm2d (training-mode statistics).
# ----------------------------------------------------------------------------
def up_reference(x_nhwc, weight, gamma, beta):
    N, H, W, Cin = x_nhwc.shape
    Cout = weight.shape[1]
    Wout = 2 * W
    y = jnp.zeros((N, H, Wout, Cout), jnp.float32)
    for kw in range(4):
        z = jnp.einsum("nhwc,cd->nhwd", x_nhwc.astype(jnp.float32),
                       weight[:, :, 0, kw].astype(jnp.float32))
        o = jnp.arange(W) * 2 - 1 + kw          # wo = 2*wi - pad + kw
        valid = (o >= 0) & (o < Wout)
        oc = jnp.clip(o, 0, Wout - 1)
        y = y.at[:, :, oc, :].add(jnp.where(valid[None, None, :, None], z, 0.0))
    mean = y.mean(axis=(0, 1, 2))
    var = y.var(axis=(0, 1, 2))                 # biased, matches BN normalization
    return gamma * (y - mean) / jnp.sqrt(var + EPS) + beta


if __name__ == "__main__":
    key = jax.random.PRNGKey(0)
    k_x, k_w, k_g, k_x2 = jax.random.split(key, 4)

    N, H, W = 2, 4, 16
    Cin, Cout = 4, 8

    # NHWC input (equivalent PyTorch NCHW input would be x transposed to NCHW).
    x = jax.random.normal(k_x, (N, H, W, Cin), jnp.float32)
    # ConvTranspose2d weight layout: (in_channels, out_channels, kH=1, kW=4).
    weight = 0.02 * jax.random.normal(k_w, (Cin, Cout, 1, 4), jnp.float32)
    gamma = 1.0 + 0.02 * jax.random.normal(k_g, (Cout,), jnp.float32)
    beta = 0.1 * jnp.ones((Cout,), jnp.float32)

    ref = up_reference(x, weight, gamma, beta)

    # 1) lane-dense (folded) path.
    out = jax.block_until_ready(up_pallas(x, weight, gamma, beta))
    assert out.shape == (N, H, 2 * W, Cout), out.shape
    assert jnp.allclose(out, ref, atol=1e-4, rtol=1e-4), float(
        jnp.max(jnp.abs(out - ref)))

    # 2) multi-tile grid with a partial (masked) last block: NH=14, TILE=8.
    x_b = jax.random.normal(k_x2, (2, 7, W, Cin), jnp.float32)
    ref_b = up_reference(x_b, weight, gamma, beta)
    out_b = jax.block_until_ready(up_pallas(x_b, weight, gamma, beta, max_tile=8))
    assert jnp.allclose(out_b, ref_b, atol=1e-4, rtol=1e-4), float(
        jnp.max(jnp.abs(out_b - ref_b)))

    # 3) wide-channel fallback path (forced at the small shape).
    out_c = jax.block_until_ready(up_pallas(x, weight, gamma, beta, force_wide=True))
    assert jnp.allclose(out_c, ref, atol=1e-4, rtol=1e-4), float(
        jnp.max(jnp.abs(out_c - ref)))

    print("KERNEL_OK")
</pallas_src>

<mosaic_0001>
module attributes {stable_mosaic.version = 11 : i64} {
  func.func @_folded_stats_kernel(%arg0: i32, %arg1: memref<8x64xf32, #tpu.memory_space<vmem>>, %arg2: memref<64x256xf32, #tpu.memory_space<vmem>>, %arg3: memref<1x2x256xf32, #tpu.memory_space<vmem>>) attributes {dimension_semantics = [#tpu.dimension_semantics<parallel>], iteration_bounds = array<i64: 1>, scalar_prefetch = 0 : i64, scratch_operands = 0 : i64, tpu.core_type = #tpu.core_type<tc>, window_params = [{transform_indices = @transform_0, window_bounds = array<i64: 8, 64>}, {pipeline_mode = #tpu.pipeline_mode<synchronous>, transform_indices = @transform_1, window_bounds = array<i64: 64, 256>}, {transform_indices = @transform_2, window_bounds = array<i64: 1, 2, 256>}]} {
    %c0 = arith.constant 0 : index
    %c0_0 = arith.constant 0 : index
    %0 = vector.load %arg1[%c0, %c0_0] : memref<8x64xf32, #tpu.memory_space<vmem>>, vector<8x64xf32>
    %c0_1 = arith.constant 0 : index
    %c0_2 = arith.constant 0 : index
    %1 = vector.load %arg2[%c0_1, %c0_2] : memref<64x256xf32, #tpu.memory_space<vmem>>, vector<64x256xf32>
    %cst = arith.constant dense<0.000000e+00> : vector<8x256xf32>
    %2 = tpu.matmul %0, %1, %cst {dimension_numbers = #tpu.dot_dimension_numbers<[1], [0], [0], [1], [0, 0, 1, 1], [], []>} : vector<8x64xf32>, vector<64x256xf32>, vector<8x256xf32> -> vector<8x256xf32>
    %c8_i32 = arith.constant 8 : i32
    %3 = arith.muli %arg0, %c8_i32 : i32
    %4 = tpu.iota {dimensions = array<i32: 0>} : vector<8x1xi32>
    %5 = vector.broadcast %3 : i32 to vector<8x1xi32>
    %6 = arith.addi %5, %4 : vector<8x1xi32>
    %c8_i32_3 = arith.constant 8 : i32
    %7 = vector.broadcast %c8_i32_3 : i32 to vector<8x1xi32>
    %8 = arith.cmpi slt, %6, %7 : vector<8x1xi32>
    %9 = arith.extui %8 : vector<8x1xi1> to vector<8x1xi32>
    %10 = arith.sitofp %9 : vector<8x1xi32> to vector<8x1xf32>
    %cst_4 = arith.constant dense<0.000000e+00> : vector<1xf32>
    %11 = vector.multi_reduction <add>, %10, %cst_4 [0] : vector<8x1xf32> to vector<1xf32>
    %12 = vector.shape_cast %11 : vector<1xf32> to vector<1x1xf32>
    %cst_5 = arith.constant 0.000000e+00 : f32
    %13 = vector.shape_cast %8 : vector<8x1xi1> to vector<8x1xi1>
    %14 = vector.broadcast %13 : vector<8x1xi1> to vector<8x256xi1>
    %15 = vector.broadcast %cst_5 : f32 to vector<8x256xf32>
    %16 = arith.select %14, %2, %15 : vector<8x256xi1>, vector<8x256xf32>
    %cst_6 = arith.constant dense<0.000000e+00> : vector<256xf32>
    %17 = vector.multi_reduction <add>, %16, %cst_6 [0] : vector<8x256xf32> to vector<256xf32>
    %18 = vector.shape_cast %17 : vector<256xf32> to vector<1x256xf32>
    %cst_7 = arith.constant 1.000000e+00 : f32
    %19 = vector.broadcast %cst_7 : f32 to vector<1x1xf32>
    %20 = arith.maximumf %12, %19 : vector<1x1xf32>
    %21 = vector.broadcast %20 : vector<1x1xf32> to vector<1x256xf32>
    %22 = arith.divf %18, %21 : vector<1x256xf32>
    %23 = vector.broadcast %22 : vector<1x256xf32> to vector<8x256xf32>
    %24 = arith.subf %2, %23 : vector<8x256xf32>
    %cst_8 = arith.constant 0.000000e+00 : f32
    %25 = vector.shape_cast %8 : vector<8x1xi1> to vector<8x1xi1>
    %26 = vector.broadcast %25 : vector<8x1xi1> to vector<8x256xi1>
    %27 = vector.broadcast %cst_8 : f32 to vector<8x256xf32>
    %28 = arith.select %26, %24, %27 : vector<8x256xi1>, vector<8x256xf32>
    %29 = arith.mulf %28, %28 : vector<8x256xf32>
    %cst_9 = arith.constant dense<0.000000e+00> : vector<256xf32>
    %30 = vector.multi_reduction <add>, %29, %cst_9 [0] : vector<8x256xf32> to vector<256xf32>
    %31 = vector.shape_cast %30 : vector<256xf32> to vector<1x256xf32>
    %32 = tpu.concatenate %18, %31 in 0 : vector<1x256xf32>, vector<1x256xf32> -> vector<2x256xf32>
    %c0_10 = arith.constant 0 : index
    %c0_11 = arith.constant 0 : index
    %c0_12 = arith.constant 0 : index
    %33 = vector.load %arg3[%c0_10, %c0_11, %c0_12] : memref<1x2x256xf32, #tpu.memory_space<vmem>>, vector<1x2x256xf32>
    %34 = vector.shape_cast %33 : vector<1x2x256xf32> to vector<2x256xf32>
    %35 = vector.shape_cast %32 : vector<2x256xf32> to vector<1x2x256xf32>
    tpu.vector_store %arg3[%c0_10, %c0_11, %c0_12], %35 {strides = array<i32>} : memref<1x2x256xf32, #tpu.memory_space<vmem>>, vector<1x2x256xf32>,
    return
  }
  func.func @transform_0(%arg0: i32) -> (i32, i32) {
    %c0_i32 = arith.constant 0 : i32
    %c0_i32_0 = arith.constant 0 : i32
    return %arg0, %c0_i32 : i32, i32
  }
  func.func @transform_1(%arg0: i32) -> (i32, i32) {
    %c0_i32 = arith.constant 0 : i32
    %c0_i32_0 = arith.constant 0 : i32
    %c0_i32_1 = arith.constant 0 : i32
    return %c0_i32, %c0_i32_0 : i32, i32
  }
  func.func @transform_2(%arg0: i32) -> (i32, i32, i32) {
    %c0_i32 = arith.constant 0 : i32
    %c0_i32_0 = arith.constant 0 : i32
    %c0_i32_1 = arith.constant 0 : i32
    return %arg0, %c0_i32, %c0_i32_0 : i32, i32, i32
  }
}

module attributes {stable_mosaic.version = 11 : i64} {
  func.func @_folded_apply_kernel(%arg0: i32, %arg1: memref<8x64xf32, #tpu.memory_space<vmem>>, %arg2: memref<64x256xf32, #tpu.memory_space<vmem>>, %arg3: memref<1x256xf32, #tpu.memory_space<vmem>>, %arg4: memref<1x256xf32, #tpu.memory_space<vmem>>, %arg5: memref<8x256xf32, #tpu.memory_space<vmem>>) attributes {dimension_semantics = [#tpu.dimension_semantics<parallel>], iteration_bounds = array<i64: 1>, scalar_prefetch = 0 : i64, scratch_operands = 0 : i64, tpu.core_type = #tpu.core_type<tc>, window_params = [{transform_indices = @transform_0, window_bounds = array<i64: 8, 64>}, {pipeline_mode = #tpu.pipeline_mode<synchronous>, transform_indices = @transform_1, window_bounds = array<i64: 64, 256>}, {pipeline_mode = #tpu.pipeline_mode<synchronous>, transform_indices = @transform_2, window_bounds = array<i64: 1, 256>}, {pipeline_mode = #tpu.pipeline_mode<synchronous>, transform_indices = @transform_3, window_bounds = array<i64: 1, 256>}, {transform_indices = @transform_4, window_bounds = array<i64: 8, 256>}]} {
    %c0 = arith.constant 0 : index
    %c0_0 = arith.constant 0 : index
    %0 = vector.load %arg1[%c0, %c0_0] : memref<8x64xf32, #tpu.memory_space<vmem>>, vector<8x64xf32>
    %c0_1 = arith.constant 0 : index
    %c0_2 = arith.constant 0 : index
    %1 = vector.load %arg2[%c0_1, %c0_2] : memref<64x256xf32, #tpu.memory_space<vmem>>, vector<64x256xf32>
    %cst = arith.constant dense<0.000000e+00> : vector<8x256xf32>
    %2 = tpu.matmul %0, %1, %cst {dimension_numbers = #tpu.dot_dimension_numbers<[1], [0], [0], [1], [0, 0, 1, 1], [], []>} : vector<8x64xf32>, vector<64x256xf32>, vector<8x256xf32> -> vector<8x256xf32>
    %c0_3 = arith.constant 0 : index
    %c0_4 = arith.constant 0 : index
    %3 = vector.load %arg3[%c0_3, %c0_4] : memref<1x256xf32, #tpu.memory_space<vmem>>, vector<1x256xf32>
    %4 = vector.broadcast %3 : vector<1x256xf32> to vector<8x256xf32>
    %5 = arith.mulf %2, %4 : vector<8x256xf32>
    %c0_5 = arith.constant 0 : index
    %c0_6 = arith.constant 0 : index
    %6 = vector.load %arg4[%c0_5, %c0_6] : memref<1x256xf32, #tpu.memory_space<vmem>>, vector<1x256xf32>
    %7 = vector.broadcast %6 : vector<1x256xf32> to vector<8x256xf32>
    %8 = arith.addf %5, %7 : vector<8x256xf32>
    %c0_7 = arith.constant 0 : index
    %c0_8 = arith.constant 0 : index
    %9 = vector.load %arg5[%c0_7, %c0_8] : memref<8x256xf32, #tpu.memory_space<vmem>>, vector<8x256xf32>
    tpu.vector_store %arg5[%c0_7, %c0_8], %8 {strides = array<i32>} : memref<8x256xf32, #tpu.memory_space<vmem>>, vector<8x256xf32>,
    return
  }
  func.func @transform_0(%arg0: i32) -> (i32, i32) {
    %c0_i32 = arith.constant 0 : i32
    %c0_i32_0 = arith.constant 0 : i32
    return %arg0, %c0_i32 : i32, i32
  }
  func.func @transform_1(%arg0: i32) -> (i32, i32) {
    %c0_i32 = arith.constant 0 : i32
    %c0_i32_0 = arith.constant 0 : i32
    %c0_i32_1 = arith.constant 0 : i32
    return %c0_i32, %c0_i32_0 : i32, i32
  }
  func.func @transform_2(%arg0: i32) -> (i32, i32) {
    %c0_i32 = arith.constant 0 : i32
    %c0_i32_0 = arith.constant 0 : i32
    %c0_i32_1 = arith.constant 0 : i32
    return %c0_i32, %c0_i32_0 : i32, i32
  }
  func.func @transform_3(%arg0: i32) -> (i32, i32) {
    %c0_i32 = arith.constant 0 : i32
    %c0_i32_0 = arith.constant 0 : i32
    %c0_i32_1 = arith.constant 0 : i32
    return %c0_i32, %c0_i32_0 : i32, i32
  }
  func.func @transform_4(%arg0: i32) -> (i32, i32) {
    %c0_i32 = arith.constant 0 : i32
    %c0_i32_0 = arith.constant 0 : i32
    return %arg0, %c0_i32 : i32, i32
  }
}

</mosaic_0001>

<llo_original>
// kernel: squeeze.4
$region0: #{squeeze.4}
  %s0 = inlined_call_operand.vmem [shape: f32[256], index: 0, kind: input, shape index: {}]
  %s1 = inlined_call_operand.vmem [shape: f32[32,8], index: 1, kind: output, shape index: {}]
  $region1: #{squeeze.4} parent=0
    #allocation0 [shape = 'u8[4096]{0}', space=vmem, size = 0x1000, scoped, tag = 'scoped mem for input reshape']
    %s3 = sshllo.u32 0, 2
    %v4 = vld [vmem:[%s0] sm:%s3]
    %5 = vst [vmem:[#allocation0] sm:%s3] %v4
    %v6 = vld [vmem:[#allocation0] sm:$0x3]
    %vm7 = vcmask 64512
    %8 = vst.msk [vmem:[%s1] ss:$16 sm:$0x3] %vm7, %v6
    %v9 = vld [vmem:[#allocation0] sm:$0x3]
    %10 = vrot.lane.b32.xlu0 %v9, 120
    %v11 = vpop.permute.xlu0 %10
    %vm12 = vcmask 64512
    %s13 = scalar_lea.vmem %s1, 1
    %14 = vst.msk [vmem:[%s13] ss:$16 sm:$0x3] %vm12, %v11
    %v15 = vld [vmem:[#allocation0] sm:$0x3]
    %16 = vrot.lane.b32.xlu0 %v15, 112
    %v17 = vpop.permute.xlu0 %16
    %vm18 = vcmask 64512
    %s19 = scalar_lea.vmem %s1, 2
    %20 = vst.msk [vmem:[%s19] ss:$16 sm:$0x3] %vm18, %v17
    %v21 = vld [vmem:[#allocation0] sm:$0x3]
    %22 = vrot.lane.b32.xlu0 %v21, 104
    %v23 = vpop.permute.xlu0 %22
    %vm24 = vcmask 64512
    %s25 = scalar_lea.vmem %s1, 3
    %26 = vst.msk [vmem:[%s25] ss:$16 sm:$0x3] %vm24, %v23
    %v27 = vld [vmem:[#allocation0] sm:$0x3]
    %28 = vrot.lane.b32.xlu0 %v27, 96
    %v29 = vpop.permute.xlu0 %28
    %vm30 = vcmask 64512
    %s31 = scalar_lea.vmem %s1, 4
    %32 = vst.msk [vmem:[%s31] ss:$16 sm:$0x3] %vm30, %v29
    %v33 = vld [vmem:[#allocation0] sm:$0x3]
    %34 = vrot.lane.b32.xlu0 %v33, 88
    %v35 = vpop.permute.xlu0 %34
    %vm36 = vcmask 64512
    %s37 = scalar_lea.vmem %s1, 5
    %38 = vst.msk [vmem:[%s37] ss:$16 sm:$0x3] %vm36, %v35
    %v39 = vld [vmem:[#allocation0] sm:$0x3]
    %40 = vrot.lane.b32.xlu0 %v39, 80
    %v41 = vpop.permute.xlu0 %40
    %vm42 = vcmask 64512
    %s43 = scalar_lea.vmem %s1, 6
    %44 = vst.msk [vmem:[%s43] ss:$16 sm:$0x3] %vm42, %v41
    %v45 = vld [vmem:[#allocation0] sm:$0x3]
    %46 = vrot.lane.b32.xlu0 %v45, 72
    %v47 = vpop.permute.xlu0 %46
    %vm48 = vcmask 64512
    %s49 = scalar_lea.vmem %s1, 7
    %50 = vst.msk [vmem:[%s49] ss:$16 sm:$0x3] %vm48, %v47
    %v51 = vld [vmem:[#allocation0] sm:$0x3]
    %52 = vrot.lane.b32.xlu0 %v51, 64
    %v53 = vpop.permute.xlu0 %52
    %vm54 = vcmask 64512
    %s55 = scalar_lea.vmem %s1, 8
    %56 = vst.msk [vmem:[%s55] ss:$16 sm:$0x3] %vm54, %v53
    %v57 = vld [vmem:[#allocation0] sm:$0x3]
    %58 = vrot.lane.b32.xlu0 %v57, 56
    %v59 = vpop.permute.xlu0 %58
    %vm60 = vcmask 64512
    %s61 = scalar_lea.vmem %s1, 9
    %62 = vst.msk [vmem:[%s61] ss:$16 sm:$0x3] %vm60, %v59
    %v63 = vld [vmem:[#allocation0] sm:$0x3]
    %64 = vrot.lane.b32.xlu0 %v63, 48
    %v65 = vpop.permute.xlu0 %64
    %vm66 = vcmask 64512
    %s67 = scalar_lea.vmem %s1, 10
    %68 = vst.msk [vmem:[%s67] ss:$16 sm:$0x3] %vm66, %v65
    %v69 = vld [vmem:[#allocation0] sm:$0x3]
    %70 = vrot.lane.b32.xlu0 %v69, 40
    %v71 = vpop.permute.xlu0 %70
    %vm72 = vcmask 64512
    %s73 = scalar_lea.vmem %s1, 11
    %74 = vst.msk [vmem:[%s73] ss:$16 sm:$0x3] %vm72, %v71
    %v75 = vld [vmem:[#allocation0] sm:$0x3]
    %76 = vrot.lane.b32.xlu0 %v75, 32
    %v77 = vpop.permute.xlu0 %76
    %vm78 = vcmask 64512
    %s79 = scalar_lea.vmem %s1, 12
    %80 = vst.msk [vmem:[%s79] ss:$16 sm:$0x3] %vm78, %v77
    %v81 = vld [vmem:[#allocation0] sm:$0x3]
    %82 = vrot.lane.b32.xlu0 %v81, 24
    %v83 = vpop.permute.xlu0 %82
    %vm84 = vcmask 64512
    %s85 = scalar_lea.vmem %s1, 13
    %86 = vst.msk [vmem:[%s85] ss:$16 sm:$0x3] %vm84, %v83
    %v87 = vld [vmem:[#allocation0] sm:$0x3]
    %88 = vrot.lane.b32.xlu0 %v87, 16
    %v89 = vpop.permute.xlu0 %88
    %vm90 = vcmask 64512
    %s91 = scalar_lea.vmem %s1, 14
    %92 = vst.msk [vmem:[%s91] ss:$16 sm:$0x3] %vm90, %v89
    %v93 = vld [vmem:[#allocation0] sm:$0x3]
    %94 = vrot.lane.b32.xlu0 %v93, 8
    %v95 = vpop.permute.xlu0 %94
    %vm96 = vcmask 64512
    %s97 = scalar_lea.vmem %s1, 15
    %98 = vst.msk [vmem:[%s97] ss:$16 sm:$0x3] %vm96, %v95

// kernel: tile.13
$region0: #{tile.13}
  #allocation0 [shape = 's32[1]{0}', space=sflag, size = 0x4, scoped, tag = 'scoped memory for tile.13']
  %s0 = inlined_call_operand.vmem [shape: f32[8], index: 0, kind: input, shape index: {}]
  %s1 = inlined_call_operand.vmem [shape: f32[32,8], index: 1, kind: output, shape index: {}]
  // Predicated region
  $region2: #{tile.13} parent=0 // pred_check
    _
  $region3: #{tile.13} parent=0 // pred_check_branch
    %3 = sbr.rel (0) target = $region5
  $region4: #{tile.13} parent=0 // pred_region
    _
  $region5: #{tile.13} parent=0 // pred_fallthru
    _
  %v4 = vld [vmem:[%s0] ss:$0 sm:$0xff]
  %5 = vst [vmem:[%s1] sm:$0xff] %v4
  %s6 = scalar_lea.vmem %s1, 8
  %7 = vst [vmem:[%s6] sm:$0xff] %v4
  %s8 = scalar_lea.vmem %s1, 16
  %9 = vst [vmem:[%s8] sm:$0xff] %v4
  %s10 = scalar_lea.vmem %s1, 24
  %11 = vst [vmem:[%s10] sm:$0xff] %v4

// kernel: tile.14
$region0: #{tile.14}
  %s0 = inlined_call_operand.vmem [shape: f32[32,8], index: 0, kind: input, shape index: {}]
  %s1 = inlined_call_operand.vmem [shape: f32[1,256], index: 1, kind: output, shape index: {}]
  $region1: #{tile.14} parent=0
    #allocation0 [shape = 'u8[8192]{0}', space=vmem, size = 0x2000, scoped, tag = 'scoped mem for output reshape']
    %s2 = smov 3
    %v3 = vld [vmem:[%s0] ss:$16 sm:%s2]
    %vm4 = vcmask 64512
    %5 = vst.msk [vmem:[#allocation0] ss:$8 sm:$0x3] %vm4, %v3
    %s6 = scalar_lea.vmem %s0, 15
    %s7 = smov 3
    %v8 = vld [vmem:[%s6] ss:$16 sm:%s7]
    %9 = vrot.lane.b32.xlu0 %v8, 120
    %v10 = vpop.permute.xlu0 %9
    %vm11 = vcmask 1048512
    %12 = vst.msk [vmem:[#allocation0] ss:$8 sm:$0x3] %vm11, %v10
    %s13 = scalar_lea.vmem %s0, 14
    %s14 = smov 3
    %v15 = vld [vmem:[%s13] ss:$16 sm:%s14]
    %16 = vrot.lane.b32.xlu0 %v15, 112
    %v17 = vpop.permute.xlu0 %16
    %vm18 = vcmask 982912
    %19 = vst.msk [vmem:[#allocation0] ss:$8 sm:$0x3] %vm18, %v17
    %s20 = scalar_lea.vmem %s0, 13
    %s21 = smov 3
    %v22 = vld [vmem:[%s20] ss:$16 sm:%s21]
    %23 = vrot.lane.b32.xlu0 %v22, 104
    %v24 = vpop.permute.xlu0 %23
    %vm25 = vcmask 917312
    %26 = vst.msk [vmem:[#allocation0] ss:$8 sm:$0x3] %vm25, %v24
    %s27 = scalar_lea.vmem %s0, 12
    %s28 = smov 3
    %v29 = vld [vmem:[%s27] ss:$16 sm:%s28]
    %30 = vrot.lane.b32.xlu0 %v29, 96
    %v31 = vpop.permute.xlu0 %30
    %vm32 = vcmask 851712
    %33 = vst.msk [vmem:[#allocation0] ss:$8 sm:$0x3] %vm32, %v31
    %s34 = scalar_lea.vmem %s0, 11
    %s35 = smov 3
    %v36 = vld [vmem:[%s34] ss:$16 sm:%s35]
    %37 = vrot.lane.b32.xlu0 %v36, 88
    %v38 = vpop.permute.xlu0 %37
    %vm39 = vcmask 786112
    %40 = vst.msk [vmem:[#allocation0] ss:$8 sm:$0x3] %vm39, %v38
    %s41 = scalar_lea.vmem %s0, 10
    %s42 = smov 3
    %v43 = vld [vmem:[%s41] ss:$16 sm:%s42]
    %44 = vrot.lane.b32.xlu0 %v43, 80
    %v45 = vpop.permute.xlu0 %44
    %vm46 = vcmask 720512
    %47 = vst.msk [vmem:[#allocation0] ss:$8 sm:$0x3] %vm46, %v45
    %s48 = scalar_lea.vmem %s0, 9
    %s49 = smov 3
    %v50 = vld [vmem:[%s48] ss:$16 sm:%s49]
    %51 = vrot.lane.b32.xlu0 %v50, 72
    %v52 = vpop.permute.xlu0 %51
    %vm53 = vcmask 654912
    %54 = vst.msk [vmem:[#allocation0] ss:$8 sm:$0x3] %vm53, %v52
    %s55 = scalar_lea.vmem %s0, 8
    %s56 = smov 3
    %v57 = vld [vmem:[%s55] ss:$16 sm:%s56]
    %58 = vrot.lane.b32.xlu0 %v57, 64
    %v59 = vpop.permute.xlu0 %58
    %vm60 = vcmask 589312
    %61 = vst.msk [vmem:[#allocation0] ss:$8 sm:$0x3] %vm60, %v59
    %s62 = scalar_lea.vmem %s0, 7
    %s63 = smov 3
    %v64 = vld [vmem:[%s62] ss:$16 sm:%s63]
    %65 = vrot.lane.b32.xlu0 %v64, 56
    %v66 = vpop.permute.xlu0 %65
    %vm67 = vcmask 523712
    %68 = vst.msk [vmem:[#allocation0] ss:$8 sm:$0x3] %vm67, %v66
    %s69 = scalar_lea.vmem %s0, 6
    %s70 = smov 3
    %v71 = vld [vmem:[%s69] ss:$16 sm:%s70]
    %72 = vrot.lane.b32.xlu0 %v71, 48
    %v73 = vpop.permute.xlu0 %72
    %vm74 = vcmask 458112
    %75 = vst.msk [vmem:[#allocation0] ss:$8 sm:$0x3] %vm74, %v73
    %s76 = scalar_lea.vmem %s0, 5
    %s77 = smov 3
    %v78 = vld [vmem:[%s76] ss:$16 sm:%s77]
    %79 = vrot.lane.b32.xlu0 %v78, 40
    %v80 = vpop.permute.xlu0 %79
    %vm81 = vcmask 392512
    %82 = vst.msk [vmem:[#allocation0] ss:$8 sm:$0x3] %vm81, %v80
    %s83 = scalar_lea.vmem %s0, 4
    %s84 = smov 3
    %v85 = vld [vmem:[%s83] ss:$16 sm:%s84]
    %86 = vrot.lane.b32.xlu0 %v85, 32
    %v87 = vpop.permute.xlu0 %86
    %vm88 = vcmask 326912
    %89 = vst.msk [vmem:[#allocation0] ss:$8 sm:$0x3] %vm88, %v87
    %s90 = scalar_lea.vmem %s0, 3
    %s91 = smov 3
    %v92 = vld [vmem:[%s90] ss:$16 sm:%s91]
    %93 = vrot.lane.b32.xlu0 %v92, 24
    %v94 = vpop.permute.xlu0 %93
    %vm95 = vcmask 261312
    %96 = vst.msk [vmem:[#allocation0] ss:$8 sm:$0x3] %vm95, %v94
    %s97 = scalar_lea.vmem %s0, 2
    %s98 = smov 3
    %v99 = vld [vmem:[%s97] ss:$16 sm:%s98]
    %100 = vrot.lane.b32.xlu0 %v99, 16
    %v101 = vpop.permute.xlu0 %100
    %vm102 = vcmask 195712
    %103 = vst.msk [vmem:[#allocation0] ss:$8 sm:$0x3] %vm102, %v101
    %s104 = scalar_lea.vmem %s0, 1
    %s105 = smov 3
    %v106 = vld [vmem:[%s104] ss:$16 sm:%s105]
    %107 = vrot.lane.b32.xlu0 %v106, 8
    %v108 = vpop.permute.xlu0 %107
    %vm109 = vcmask 130112
    %110 = vst.msk [vmem:[#allocation0] ss:$8 sm:$0x3] %vm109, %v108
    %s112 = sshllo.u32 0, 1
    %v114 = vld [vmem:[#allocation0] sm:%s112]
    %s115 = sshllo.u32 0, 1
    %116 = vst [vmem:[%s1] sm:%s115] %v114
    %s117 = scalar_lea.vmem [#allocation0], 8
    %v118 = vld [vmem:[%s117] sm:%s112]
    %s119 = sshllo.u32 0, 1
    %s120 = scalar_lea.vmem %s1, 1
    %121 = vst [vmem:[%s120] sm:%s119] %v118

// kernel: up_pallas.2
$region0: #{up_pallas.2}
  #allocation0 [shape = 'u32[]', space=smem, size = 0x4, offset = 0x4, fixed_abs, tag = 'smem constant byte address 0x4 - core index']
  #allocation1 [shape = 'u32[144,128]{1,0:T(1,128)}', space=vmem, size = 0x12000, scoped, tag = 'internal scratch']
  %s0 = inlined_call_operand.vmem [shape: f32[8,64], index: 0, kind: input, shape index: {}]
  %s1 = inlined_call_operand.vmem [shape: f32[64,256], index: 1, kind: input, shape index: {}]
  %s2 = inlined_call_operand.vmem [shape: f32[1,2,256], index: 2, kind: output, shape index: {}]
  %s3 = sld [smem:[#allocation0]]
  $region18: #{up_pallas.2} parent=0
    _
  %s5 = ssub.s32 1, %s3
  %s6 = scalar_select 0, %s5, %s3
  // Predicated region
  $region2: #{up_pallas.2} parent=0 // pred_check
    _
  $region3: #{up_pallas.2} parent=0 // pred_check_branch
    %8 = sbr.rel (0) target = $region5
  $region4: #{up_pallas.2} parent=0 // pred_region
    _
  $region5: #{up_pallas.2} parent=0 // pred_fallthru
    _
  // Predicated region
  $region6: #{up_pallas.2} parent=0 // pred_check
    _
  $region7: #{up_pallas.2} parent=0 // pred_check_branch
    %10 = sbr.rel (0) target = $region9
  $region8: #{up_pallas.2} parent=0 // pred_region
    _
  $region9: #{up_pallas.2} parent=0 // pred_fallthru
    _
  %v11 = vld [vmem:[%s0] sm:$0xff]
  %v12 = vld [vmem:[%s1] sm:$0xff]
  %v13 = vld [vmem:[%s1 + $0x8] sm:$0xff]
  %v14 = vld [vmem:[%s1 + $0x10] sm:$0xff]
  %v15 = vld [vmem:[%s1 + $0x18] sm:$0xff]
  %v16 = vld [vmem:[%s1 + $0x20] sm:$0xff]
  %v17 = vld [vmem:[%s1 + $0x28] sm:$0xff]
  %v18 = vld [vmem:[%s1 + $0x30] sm:$0xff]
  %v19 = vld [vmem:[%s1 + $0x38] sm:$0xff]
  %v20 = vld [vmem:[%s1 + $0x40] sm:$0xff]
  %v21 = vld [vmem:[%s1 + $0x48] sm:$0xff]
  %v22 = vld [vmem:[%s1 + $0x50] sm:$0xff]
  %v23 = vld [vmem:[%s1 + $0x58] sm:$0xff]
  %v24 = vld [vmem:[%s1 + $0x60] sm:$0xff]
  %v25 = vld [vmem:[%s1 + $0x68] sm:$0xff]
  %v26 = vld [vmem:[%s1 + $0x70] sm:$0xff]
  %v27 = vld [vmem:[%s1 + $0x78] sm:$0xff]
  %vm28 = vcmask 523264
  %v30 = vsel %vm28, %v11, 0
  %32 = vmatprep.subr.mxu0 %v13
  %33 = vmatpush1.msra.mxu0 %v12
  %34 = vmatprep.subr.mxu0 %v15
  %35 = vmatpush1.msra.mxu0 %v14
  %36 = vmatprep.subr.mxu0 %v17
  %37 = vmatpush1.msra.mxu0 %v16
  %38 = vmatprep.subr.mxu0 %v19
  %39 = vmatpush1.msra.mxu0 %v18
  %40 = vmatprep.subr.mxu0 %v21
  %41 = vmatpush1.msra.mxu0 %v20
  %42 = vmatprep.subr.mxu0 %v23
  %43 = vmatpush1.msra.mxu0 %v22
  %44 = vmatprep.subr.mxu0 %v25
  %45 = vmatpush1.msra.mxu0 %v24
  %46 = vmatprep.subr.mxu0 %v27
  %47 = vmatpush1.msra.mxu0 %v26
  %48 = vmatprep.subr.mxu0 0.0
  %49 = vmatpush1.msra.mxu0 0.0
  %50 = vmatprep.subr.mxu0 0.0
  %51 = vmatpush1.msra.mxu0 0.0
  %52 = vmatprep.subr.mxu0 0.0
  %53 = vmatpush1.msra.mxu0 0.0
  %54 = vmatprep.subr.mxu0 0.0
  %55 = vmatpush1.msra.mxu0 0.0
  %56 = vmatprep.subr.mxu0 0.0
  %57 = vmatpush1.msra.mxu0 0.0
  %58 = vmatprep.subr.mxu0 0.0
  %59 = vmatpush1.msra.mxu0 0.0
  %60 = vmatprep.subr.mxu0 0.0
  %61 = vmatpush1.msra.mxu0 0.0
  %62 = vmatprep.subr.mxu0 0.0
  %63 = vmatpush1.msra.mxu0 0.0
  %64 = vmatprep.subr.mxu0 0.0
  %65 = vmatpush1.msra.mxu0 0.0
  %66 = vmatprep.subr.mxu0 0.0
  %67 = vmatpush1.msra.mxu0 0.0
  %68 = vmatprep.subr.mxu0 0.0
  %69 = vmatpush1.msra.mxu0 0.0
  %70 = vmatprep.subr.mxu0 0.0
  %71 = vmatpush1.msra.mxu0 0.0
  %72 = vmatprep.subr.mxu0 0.0
  %73 = vmatpush1.msra.mxu0 0.0
  %74 = vmatprep.subr.mxu0 0.0
  %75 = vmatpush1.msra.mxu0 0.0
  %76 = vmatprep.subr.mxu0 0.0
  %77 = vmatpush1.msra.mxu0 0.0
  %78 = vmatprep.subr.mxu0 0.0
  %79 = vmatpush1.msra.mxu0 0.0
  %80 = vmatprep.subr.mxu0 0.0
  %81 = vmatpush1.msra.mxu0 0.0
  %82 = vmatprep.subr.mxu0 0.0
  %83 = vmatpush1.msra.mxu0 0.0
  %84 = vmatprep.subr.mxu0 0.0
  %85 = vmatpush1.msra.mxu0 0.0
  %86 = vmatprep.subr.mxu0 0.0
  %87 = vmatpush1.msra.mxu0 0.0
  %88 = vmatprep.subr.mxu0 0.0
  %89 = vmatpush1.msra.mxu0 0.0
  %90 = vmatprep.subr.mxu0 0.0
  %91 = vmatpush1.msra.mxu0 0.0
  %92 = vmatprep.subr.mxu0 0.0
  %93 = vmatpush1.msra.mxu0 0.0
  %94 = vmatprep.subr.mxu0 0.0
  %95 = vmatpush1.msra.mxu0 0.0
  %96 = vmatprep.mubr.f32.mxu0 0.0
  %97 = vmatmul.mubr.f32.gmra.mrb[0].mxu0 %v30
  %v98 = vpop.f32.mrb[0].mxu0
  %v99 = vadd.f32 0.0, %v98
  %v100 = vpop.f32.mrb[0].mxu0
  %v101 = vadd.f32 0.0, %v100
  %102 = vdwg.mxu0
  %s103 = smul.u32 0, 8
  %v104 = vlaneseq
  %v105 = vshrl.u32 %v104, 7
  %v106 = vstv %s103
  %v107 = vadd.s32 %v106, %v105
  %vm108 = vcmp.lt.s32.totalorder %v107, 8
  %v109 = vsel %vm108, 1, 0
  %v110 = vcvt.s32.f32 %v109
  %v111 = vrot.slane %v110, 4
  %v112 = vadd.f32 %v110, %v111
  %v113 = vrot.slane %v112, 2
  %v114 = vadd.f32 %v112, %v113
  %v115 = vrot.slane %v114, 1
  %v116 = vadd.f32 %v114, %v115
  %vm117 = vcmp.eq.s32.totalorder %v109, 1
  %v118 = vsel %vm117, %v99, 0.0
  %v119 = vsel %vm117, %v101, 0.0
  %v120 = vrot.slane %v118, 4
  %v121 = vadd.f32 %v118, %v120
  %v122 = vrot.slane %v121, 2
  %v123 = vadd.f32 %v121, %v122
  %v124 = vrot.slane %v123, 1
  %v125 = vadd.f32 %v123, %v124
  %v126 = vrot.slane %v119, 4
  %v127 = vadd.f32 %v119, %v126
  %v128 = vrot.slane %v127, 2
  %v129 = vadd.f32 %v127, %v128
  %v130 = vrot.slane %v129, 1
  %v131 = vadd.f32 %v129, %v130
  %v132 = vmax.f32 %v116, 1.0
  %v133 = vrcp.pop %v132
  %v134 = vmul.f32 %v125, %v133
  %v135 = vmul.f32 %v131, %v133
  %v136 = vsub.f32 %v99, %v134
  %v137 = vsub.f32 %v101, %v135
  %v138 = vsel %vm117, %v136, 0.0
  %v139 = vsel %vm117, %v137, 0.0
  %v140 = vmul.f32 %v138, %v138
  %v141 = vmul.f32 %v139, %v139
  %v142 = vrot.slane %v140, 4
  %v143 = vadd.f32 %v140, %v142
  %v144 = vrot.slane %v143, 2
  %v145 = vadd.f32 %v143, %v144
  %v146 = vrot.slane %v145, 1
  %v147 = vadd.f32 %v145, %v146
  %v148 = vrot.slane %v141, 4
  %v149 = vadd.f32 %v141, %v148
  %v150 = vrot.slane %v149, 2
  %v151 = vadd.f32 %v149, %v150
  %v152 = vrot.slane %v151, 1
  %v153 = vadd.f32 %v151, %v152
  %vm154 = vcmask 1040384
  %v155 = vsel %vm154, %v125, %v147
  %v156 = vsel %vm154, %v131, %v153
  %v159 = vcombine.low %v155, %v156
  %v161 = vunpack.c.l.s4 1983009808
  %v162 = vunpack.c.0.s8 %v161
  %v163 = vlaneseq
  %v164 = vshrl.u32 %v163, 7
  %v165 = vsub.s32 %v162, %v164
  %v166 = vrot.slane %v159, %v165
  %168 = vst [vmem:[%s2] sm:$0xf] %v166
  // Predicated region
  $region10: #{up_pallas.2} parent=0 // pred_check
    _
  $region11: #{up_pallas.2} parent=0 // pred_check_branch
    %170 = sbr.rel (0) target = $region13
  $region12: #{up_pallas.2} parent=0 // pred_region
    _
  $region13: #{up_pallas.2} parent=0 // pred_fallthru
    _
  // Predicated region
  $region14: #{up_pallas.2} parent=0 // pred_check
    _
  $region15: #{up_pallas.2} parent=0 // pred_check_branch
    %172 = sbr.rel (0) target = $region17
  $region16: #{up_pallas.2} parent=0 // pred_region
    _
  $region17: #{up_pallas.2} parent=0 // pred_fallthru
    _

// kernel: up_pallas.3
$region0: #{up_pallas.3}
  #allocation0 [shape = 'u32[]', space=smem, size = 0x4, offset = 0x4, fixed_abs, tag = 'smem constant byte address 0x4 - core index']
  #allocation1 [shape = 'u32[144,128]{1,0:T(1,128)}', space=vmem, size = 0x12000, scoped, tag = 'internal scratch']
  %s0 = inlined_call_operand.vmem [shape: f32[8,64], index: 0, kind: input, shape index: {}]
  %s1 = inlined_call_operand.vmem [shape: f32[64,256], index: 1, kind: input, shape index: {}]
  %s2 = inlined_call_operand.vmem [shape: f32[1,256], index: 2, kind: input, shape index: {}]
  %s3 = inlined_call_operand.vmem [shape: f32[1,256], index: 3, kind: input, shape index: {}]
  %s4 = inlined_call_operand.vmem [shape: f32[8,256], index: 4, kind: output, shape index: {}]
  %s5 = sld [smem:[#allocation0]]
  $region26: #{up_pallas.3} parent=0
    _
  %s7 = ssub.s32 1, %s5
  %s8 = scalar_select 0, %s7, %s5
  // Predicated region
  $region2: #{up_pallas.3} parent=0 // pred_check
    _
  $region3: #{up_pallas.3} parent=0 // pred_check_branch
    %10 = sbr.rel (0) target = $region5
  $region4: #{up_pallas.3} parent=0 // pred_region
    _
  $region5: #{up_pallas.3} parent=0 // pred_fallthru
    _
  // Predicated region
  $region6: #{up_pallas.3} parent=0 // pred_check
    _
  $region7: #{up_pallas.3} parent=0 // pred_check_branch
    %12 = sbr.rel (0) target = $region9
  $region8: #{up_pallas.3} parent=0 // pred_region
    _
  $region9: #{up_pallas.3} parent=0 // pred_fallthru
    _
  // Predicated region
  $region10: #{up_pallas.3} parent=0 // pred_check
    _
  $region11: #{up_pallas.3} parent=0 // pred_check_branch
    %14 = sbr.rel (0) target = $region13
  $region12: #{up_pallas.3} parent=0 // pred_region
    _
  $region13: #{up_pallas.3} parent=0 // pred_fallthru
    _
  // Predicated region
  $region14: #{up_pallas.3} parent=0 // pred_check
    _
  $region15: #{up_pallas.3} parent=0 // pred_check_branch
    %16 = sbr.rel (0) target = $region17
  $region16: #{up_pallas.3} parent=0 // pred_region
    _
  $region17: #{up_pallas.3} parent=0 // pred_fallthru
    _
  %v17 = vld [vmem:[%s0] sm:$0xff]
  %v18 = vld [vmem:[%s1] sm:$0xff]
  %v19 = vld [vmem:[%s1 + $0x8] sm:$0xff]
  %v20 = vld [vmem:[%s1 + $0x10] sm:$0xff]
  %v21 = vld [vmem:[%s1 + $0x18] sm:$0xff]
  %v22 = vld [vmem:[%s1 + $0x20] sm:$0xff]
  %v23 = vld [vmem:[%s1 + $0x28] sm:$0xff]
  %v24 = vld [vmem:[%s1 + $0x30] sm:$0xff]
  %v25 = vld [vmem:[%s1 + $0x38] sm:$0xff]
  %v26 = vld [vmem:[%s1 + $0x40] sm:$0xff]
  %v27 = vld [vmem:[%s1 + $0x48] sm:$0xff]
  %v28 = vld [vmem:[%s1 + $0x50] sm:$0xff]
  %v29 = vld [vmem:[%s1 + $0x58] sm:$0xff]
  %v30 = vld [vmem:[%s1 + $0x60] sm:$0xff]
  %v31 = vld [vmem:[%s1 + $0x68] sm:$0xff]
  %v32 = vld [vmem:[%s1 + $0x70] sm:$0xff]
  %v33 = vld [vmem:[%s1 + $0x78] sm:$0xff]
  %vm34 = vcmask 523264
  %v36 = vsel %vm34, %v17, 0
  %38 = vmatprep.subr.mxu0 %v19
  %39 = vmatpush1.msra.mxu0 %v18
  %40 = vmatprep.subr.mxu0 %v21
  %41 = vmatpush1.msra.mxu0 %v20
  %42 = vmatprep.subr.mxu0 %v23
  %43 = vmatpush1.msra.mxu0 %v22
  %44 = vmatprep.subr.mxu0 %v25
  %45 = vmatpush1.msra.mxu0 %v24
  %46 = vmatprep.subr.mxu0 %v27
  %47 = vmatpush1.msra.mxu0 %v26
  %48 = vmatprep.subr.mxu0 %v29
  %49 = vmatpush1.msra.mxu0 %v28
  %50 = vmatprep.subr.mxu0 %v31
  %51 = vmatpush1.msra.mxu0 %v30
  %52 = vmatprep.subr.mxu0 %v33
  %53 = vmatpush1.msra.mxu0 %v32
  %54 = vmatprep.subr.mxu0 0.0
  %55 = vmatpush1.msra.mxu0 0.0
  %56 = vmatprep.subr.mxu0 0.0
  %57 = vmatpush1.msra.mxu0 0.0
  %58 = vmatprep.subr.mxu0 0.0
  %59 = vmatpush1.msra.mxu0 0.0
  %60 = vmatprep.subr.mxu0 0.0
  %61 = vmatpush1.msra.mxu0 0.0
  %62 = vmatprep.subr.mxu0 0.0
  %63 = vmatpush1.msra.mxu0 0.0
  %64 = vmatprep.subr.mxu0 0.0
  %65 = vmatpush1.msra.mxu0 0.0
  %66 = vmatprep.subr.mxu0 0.0
  %67 = vmatpush1.msra.mxu0 0.0
  %68 = vmatprep.subr.mxu0 0.0
  %69 = vmatpush1.msra.mxu0 0.0
  %70 = vmatprep.subr.mxu0 0.0
  %71 = vmatpush1.msra.mxu0 0.0
  %72 = vmatprep.subr.mxu0 0.0
  %73 = vmatpush1.msra.mxu0 0.0
  %74 = vmatprep.subr.mxu0 0.0
  %75 = vmatpush1.msra.mxu0 0.0
  %76 = vmatprep.subr.mxu0 0.0
  %77 = vmatpush1.msra.mxu0 0.0
  %78 = vmatprep.subr.mxu0 0.0
  %79 = vmatpush1.msra.mxu0 0.0
  %80 = vmatprep.subr.mxu0 0.0
  %81 = vmatpush1.msra.mxu0 0.0
  %82 = vmatprep.subr.mxu0 0.0
  %83 = vmatpush1.msra.mxu0 0.0
  %84 = vmatprep.subr.mxu0 0.0
  %85 = vmatpush1.msra.mxu0 0.0
  %86 = vmatprep.subr.mxu0 0.0
  %87 = vmatpush1.msra.mxu0 0.0
  %88 = vmatprep.subr.mxu0 0.0
  %89 = vmatpush1.msra.mxu0 0.0
  %90 = vmatprep.subr.mxu0 0.0
  %91 = vmatpush1.msra.mxu0 0.0
  %92 = vmatprep.subr.mxu0 0.0
  %93 = vmatpush1.msra.mxu0 0.0
  %94 = vmatprep.subr.mxu0 0.0
  %95 = vmatpush1.msra.mxu0 0.0
  %96 = vmatprep.subr.mxu0 0.0
  %97 = vmatpush1.msra.mxu0 0.0
  %98 = vmatprep.subr.mxu0 0.0
  %99 = vmatpush1.msra.mxu0 0.0
  %100 = vmatprep.subr.mxu0 0.0
  %101 = vmatpush1.msra.mxu0 0.0
  %102 = vmatprep.mubr.f32.mxu0 0.0
  %103 = vmatmul.mubr.f32.gmra.mrb[0].mxu0 %v36
  %v104 = vpop.f32.mrb[0].mxu0
  %v105 = vadd.f32 0.0, %v104
  %v106 = vpop.f32.mrb[0].mxu0
  %v107 = vadd.f32 0.0, %v106
  %108 = vdwg.mxu0
  %v109 = vld [vmem:[%s2] sm:$0x3]
  %v111 = vlaneseq
  %v112 = vshrl.u32 %v111, 7
  %v113 = vsub.s32 0, %v112
  %v114 = vrot.slane %v109, %v113
  %v115 = vlaneseq
  %v116 = vshrl.u32 %v115, 7
  %v117 = vsub.s32 1, %v116
  %v118 = vrot.slane %v109, %v117
  %v121 = vmul.f32 %v105, %v114
  %v122 = vmul.f32 %v107, %v118
  %v123 = vld [vmem:[%s3] sm:$0x3]
  %v125 = vlaneseq
  %v126 = vshrl.u32 %v125, 7
  %v127 = vsub.s32 0, %v126
  %v128 = vrot.slane %v123, %v127
  %v129 = vlaneseq
  %v130 = vshrl.u32 %v129, 7
  %v131 = vsub.s32 1, %v130
  %v132 = vrot.slane %v123, %v131
  %v135 = vadd.f32 %v121, %v128
  %v136 = vadd.f32 %v122, %v132
  %137 = vst [vmem:[%s4] sm:$0xff] %v135
  %138 = vst [vmem:[%s4 + $0x8] sm:$0xff] %v136
  // Predicated region
  $region18: #{up_pallas.3} parent=0 // pred_check
    _
  $region19: #{up_pallas.3} parent=0 // pred_check_branch
    %140 = sbr.rel (0) target = $region21
  $region20: #{up_pallas.3} parent=0 // pred_region
    _
  $region21: #{up_pallas.3} parent=0 // pred_fallthru
    _
  // Predicated region
  $region22: #{up_pallas.3} parent=0 // pred_check
    _
  $region23: #{up_pallas.3} parent=0 // pred_check_branch
    %142 = sbr.rel (0) target = $region25
  $region24: #{up_pallas.3} parent=0 // pred_region
    _
  $region25: #{up_pallas.3} parent=0 // pred_fallthru
    _

</llo_original>
